<compile_context>
chip_gen: v6e
topology: v6e:2x2x1
jax: 0.10.0
libtpu: 0.0.40
codegen_flags: <defaults>
</compile_context>

<pallas_src>
import functools

import jax
import jax.numpy as jnp
from jax.experimental import pallas as pl
from jax.experimental.pallas import tpu as pltpu


def _round_up(x, m):
    return ((x + m - 1) // m) * m


def _moving_avg_kernel(
    x_ref,      # (1, L, C)       full time series of one batch element
    o_ref,      # (1, TILE_T, C)  one output time tile
    xp_ref,     # (alloc_rows, C) VMEM scratch: replication-padded series
    *,
    kernel_size,
    stride,
    pad,
    seq_len,
    tile_t,
    data_off,
):
    c = x_ref.shape[-1]
    t = pl.program_id(1)

    # Build the replication-padded series once per batch element (t == 0).
    # Scratch layout: rows [data_off, data_off + L) hold x (sublane-aligned
    # store), rows before hold x[0] (front pad), rows after hold x[L-1]
    # (end pad + overshoot so a partial last tile never reads out of bounds).
    @pl.when(t == 0)
    def _build_padded():
        xp_ref[data_off:data_off + seq_len, :] = x_ref[0, :, :]
        if data_off > 0:
            xp_ref[0:data_off, :] = jnp.broadcast_to(
                x_ref[0, 0:1, :], (data_off, c))
        n_end = xp_ref.shape[0] - (data_off + seq_len)
        if n_end > 0:
            xp_ref[data_off + seq_len:data_off + seq_len + n_end, :] = (
                jnp.broadcast_to(x_ref[0, seq_len - 1:seq_len, :], (n_end, c)))

    # Windowed (shifted) sum for this output tile.  Global output row r needs
    # padded rows r*stride + j (j in [0, K)); padded row m lives at scratch
    # row (data_off - pad) + m.
    base = (t * tile_t) * stride + (data_off - pad)
    acc = jnp.zeros((tile_t, c), jnp.float32)
    for j in range(kernel_size):
        if stride == 1:
            sl = pl.ds(base + j, tile_t)
        else:
            # TODO(synk): stride > 1 keeps per-shift strided sublane reads;
            # a dense stride-1 compute + single strided pick would be cheaper.
            sl = pl.ds(base + j, tile_t, stride=stride)
        acc = acc + xp_ref[sl, :].astype(jnp.float32)
    o_ref[0, :, :] = (acc * (1.0 / kernel_size)).astype(o_ref.dtype)


def moving_avg(x, kernel_size, stride, *, max_tile_t=512):
    """x: (B, L, C) -> (B, L_out, C), matching the PyTorch moving_avg module."""
    b, l, c = x.shape
    pad = (kernel_size - 1) // 2
    l_pad = l + 2 * pad
    assert l_pad >= kernel_size, "sequence too short for kernel_size"
    l_out = (l_pad - kernel_size) // stride + 1

    # Output time tiling: one tile if it fits, else max_tile_t-row tiles
    # (multiple of 8 sublanes).
    tile_t = l_out if l_out <= max_tile_t else max_tile_t
    n_t = (l_out + tile_t - 1) // tile_t

    # Scratch sizing: aligned start for the real data, plus enough tail so the
    # last (possibly partial) output tile never reads out of bounds.
    data_off = _round_up(pad, 8)
    alloc_rows = max(
        (data_off - pad) + (n_t * tile_t - 1) * stride + kernel_size,
        data_off + l,
    )
    alloc_rows = _round_up(alloc_rows, 8)

    kernel = functools.partial(
        _moving_avg_kernel,
        kernel_size=kernel_size, stride=stride, pad=pad, seq_len=l,
        tile_t=tile_t, data_off=data_off,
    )

    itemsize = jnp.dtype(x.dtype).itemsize
    vmem_bytes = (2 * l * c * itemsize          # double-buffered input block
                  + 2 * tile_t * c * itemsize   # double-buffered output tile
                  + alloc_rows * c * itemsize   # padded-series scratch
                  + tile_t * c * 4)             # f32 accumulator
    vmem_limit = None
    if vmem_bytes > (12 << 20):
        # Headroom, but stay well under v7x's 64 MiB physical VMEM.
        vmem_limit = min(2 * vmem_bytes + (2 << 20), 48 << 20)
        # TODO(synk): very large L*C needs halo'd input time tiling as well.

    cost = pl.CostEstimate(
        flops=b * l_out * c * kernel_size,
        transcendentals=0,
        bytes_accessed=b * (l * c + l_out * c) * itemsize,
    )

    return pl.pallas_call(
        kernel,
        out_shape=jax.ShapeDtypeStruct((b, l_out, c), x.dtype),
        grid_spec=pltpu.PrefetchScalarGridSpec(
            num_scalar_prefetch=0,
            grid=(b, n_t),
            in_specs=[
                # Block index is independent of t -> DMA'd once per batch
                # element and kept resident across its time tiles.
                pl.BlockSpec((1, l, c), lambda i, t: (i, 0, 0)),
            ],
            out_specs=pl.BlockSpec((1, tile_t, c), lambda i, t: (i, t, 0)),
            scratch_shapes=[pltpu.VMEM((alloc_rows, c), x.dtype)],
        ),
        compiler_params=pltpu.CompilerParams(
            # t is "arbitrary": the padded-series scratch is built at t == 0
            # and reused by that batch element's later tiles.
            dimension_semantics=("parallel", "arbitrary"),
            vmem_limit_bytes=vmem_limit,
        ),
        cost_estimate=cost,
    )(x)


def moving_avg_ref(x, kernel_size, stride):
    """Pure-JAX reference matching the PyTorch module."""
    pad = (kernel_size - 1) // 2
    front = jnp.repeat(x[:, 0:1, :], pad, axis=1)
    end = jnp.repeat(x[:, -1:, :], pad, axis=1)
    xp = jnp.concatenate([front, x, end], axis=1)  # (B, L_pad, C)
    l_pad = xp.shape[1]
    l_out = (l_pad - kernel_size) // stride + 1
    windows = jnp.stack(
        [xp[:, t * stride: t * stride + kernel_size, :] for t in range(l_out)],
        axis=1,
    )  # (B, L_out, K, C)
    return windows.mean(axis=2)


if __name__ == "__main__":
    key = jax.random.PRNGKey(0)

    # Test 1: module-consistent small shapes, single time tile.
    B, L, C = 2, 16, 8
    kernel_size, stride = 5, 1
    x = jax.random.normal(key, (B, L, C), dtype=jnp.float32)
    out = jax.block_until_ready(moving_avg(x, kernel_size, stride))
    ref = moving_avg_ref(x, kernel_size, stride)
    assert out.shape == ref.shape, (out.shape, ref.shape)
    assert jnp.allclose(out, ref, atol=1e-5, rtol=1e-5), "mismatch (test 1)"

    # Test 2: multi-tile path (4 time tiles, unaligned pad).
    x2 = jax.random.normal(jax.random.PRNGKey(1), (2, 32, 8), dtype=jnp.float32)
    out2 = jax.block_until_ready(moving_avg(x2, 7, 1, max_tile_t=8))
    ref2 = moving_avg_ref(x2, 7, 1)
    assert out2.shape == ref2.shape, (out2.shape, ref2.shape)
    assert jnp.allclose(out2, ref2, atol=1e-5, rtol=1e-5), "mismatch (test 2)"

    # Test 3: partial last output tile (l_out = 24 with 16-row tiles).
    x3 = jax.random.normal(jax.random.PRNGKey(2), (2, 24, 8), dtype=jnp.float32)
    out3 = jax.block_until_ready(moving_avg(x3, 5, 1, max_tile_t=16))
    ref3 = moving_avg_ref(x3, 5, 1)
    assert out3.shape == ref3.shape, (out3.shape, ref3.shape)
    assert jnp.allclose(out3, ref3, atol=1e-5, rtol=1e-5), "mismatch (test 3)"

    print("KERNEL_OK")
</pallas_src>

<mosaic_0001>
module attributes {stable_mosaic.version = 11 : i64} {
  func.func @_moving_avg_kernel(%arg0: i32, %arg1: i32, %arg2: memref<1x16x8xf32, #tpu.memory_space<vmem>>, %arg3: memref<1x16x8xf32, #tpu.memory_space<vmem>>, %arg4: memref<32x8xf32, #tpu.memory_space<vmem>>) attributes {dimension_semantics = [#tpu.dimension_semantics<parallel>, #tpu.dimension_semantics<arbitrary>], iteration_bounds = array<i64: 2, 1>, scalar_prefetch = 0 : i64, scratch_operands = 1 : i64, tpu.core_type = #tpu.core_type<tc>, window_params = [{transform_indices = @transform_0, window_bounds = array<i64: 1, 16, 8>}, {transform_indices = @transform_1, window_bounds = array<i64: 1, 16, 8>}]} {
    %c0_i32 = arith.constant 0 : i32
    %0 = arith.cmpi eq, %arg1, %c0_i32 : i32
    %1 = arith.extui %0 : i1 to i32
    %c0_i32_0 = arith.constant 0 : i32
    %2 = arith.cmpi ne, %1, %c0_i32_0 : i32
    scf.if %2 {
      %c0_11 = arith.constant 0 : index
      %c0_12 = arith.constant 0 : index
      %c0_13 = arith.constant 0 : index
      %32 = vector.load %arg2[%c0_11, %c0_12, %c0_13] : memref<1x16x8xf32, #tpu.memory_space<vmem>>, vector<1x16x8xf32>
      %33 = vector.shape_cast %32 : vector<1x16x8xf32> to vector<16x8xf32>
      %c8 = arith.constant 8 : index
      %c0_14 = arith.constant 0 : index
      %34 = vector.load %arg4[%c8, %c0_14] : memref<32x8xf32, #tpu.memory_space<vmem>>, vector<16x8xf32>
      tpu.vector_store %arg4[%c8, %c0_14], %33 {strides = array<i32>} : memref<32x8xf32, #tpu.memory_space<vmem>>, vector<16x8xf32>,
      %c0_15 = arith.constant 0 : index
      %c0_16 = arith.constant 0 : index
      %c0_17 = arith.constant 0 : index
      %35 = vector.load %arg2[%c0_15, %c0_16, %c0_17] : memref<1x16x8xf32, #tpu.memory_space<vmem>>, vector<1x1x8xf32>
      %36 = vector.shape_cast %35 : vector<1x1x8xf32> to vector<1x8xf32>
      %37 = vector.shape_cast %36 : vector<1x8xf32> to vector<1x8xf32>
      %38 = vector.broadcast %37 : vector<1x8xf32> to vector<8x8xf32>
      %c0_18 = arith.constant 0 : index
      %c0_19 = arith.constant 0 : index
      %39 = vector.load %arg4[%c0_18, %c0_19] : memref<32x8xf32, #tpu.memory_space<vmem>>, vector<8x8xf32>
      tpu.vector_store %arg4[%c0_18, %c0_19], %38 {strides = array<i32>} : memref<32x8xf32, #tpu.memory_space<vmem>>, vector<8x8xf32>,
      %c0_20 = arith.constant 0 : index
      %c15 = arith.constant 15 : index
      %c0_21 = arith.constant 0 : index
      %40 = vector.load %arg2[%c0_20, %c15, %c0_21] : memref<1x16x8xf32, #tpu.memory_space<vmem>>, vector<1x1x8xf32>
      %41 = vector.shape_cast %40 : vector<1x1x8xf32> to vector<1x8xf32>
      %42 = vector.shape_cast %41 : vector<1x8xf32> to vector<1x8xf32>
      %43 = vector.broadcast %42 : vector<1x8xf32> to vector<8x8xf32>
      %c24 = arith.constant 24 : index
      %c0_22 = arith.constant 0 : index
      %44 = vector.load %arg4[%c24, %c0_22] : memref<32x8xf32, #tpu.memory_space<vmem>>, vector<8x8xf32>
      tpu.vector_store %arg4[%c24, %c0_22], %43 {strides = array<i32>} : memref<32x8xf32, #tpu.memory_space<vmem>>, vector<8x8xf32>,
    } else {
    }
    %c16_i32 = arith.constant 16 : i32
    %3 = arith.muli %arg1, %c16_i32 : i32
    %c1_i32 = arith.constant 1 : i32
    %4 = arith.muli %3, %c1_i32 : i32
    %c6_i32 = arith.constant 6 : i32
    %5 = arith.addi %4, %c6_i32 : i32
    %cst = arith.constant 0.000000e+00 : f32
    %6 = vector.broadcast %cst : f32 to vector<16x8xf32>
    %c0_i32_1 = arith.constant 0 : i32
    %7 = arith.addi %5, %c0_i32_1 : i32
    %8 = arith.index_cast %7 : i32 to index
    %c0 = arith.constant 0 : index
    %9 = vector.load %arg4[%8, %c0] : memref<32x8xf32, #tpu.memory_space<vmem>>, vector<16x8xf32>
    %10 = arith.addf %6, %9 : vector<16x8xf32>
    %c1_i32_2 = arith.constant 1 : i32
    %11 = arith.addi %5, %c1_i32_2 : i32
    %12 = arith.index_cast %11 : i32 to index
    %c0_3 = arith.constant 0 : index
    %13 = vector.load %arg4[%12, %c0_3] : memref<32x8xf32, #tpu.memory_space<vmem>>, vector<16x8xf32>
    %14 = arith.addf %10, %13 : vector<16x8xf32>
    %c2_i32 = arith.constant 2 : i32
    %15 = arith.addi %5, %c2_i32 : i32
    %16 = arith.index_cast %15 : i32 to index
    %c0_4 = arith.constant 0 : index
    %17 = vector.load %arg4[%16, %c0_4] : memref<32x8xf32, #tpu.memory_space<vmem>>, vector<16x8xf32>
    %18 = arith.addf %14, %17 : vector<16x8xf32>
    %c3_i32 = arith.constant 3 : i32
    %19 = arith.addi %5, %c3_i32 : i32
    %20 = arith.index_cast %19 : i32 to index
    %c0_5 = arith.constant 0 : index
    %21 = vector.load %arg4[%20, %c0_5] : memref<32x8xf32, #tpu.memory_space<vmem>>, vector<16x8xf32>
    %22 = arith.addf %18, %21 : vector<16x8xf32>
    %c4_i32 = arith.constant 4 : i32
    %23 = arith.addi %5, %c4_i32 : i32
    %24 = arith.index_cast %23 : i32 to index
    %c0_6 = arith.constant 0 : index
    %25 = vector.load %arg4[%24, %c0_6] : memref<32x8xf32, #tpu.memory_space<vmem>>, vector<16x8xf32>
    %26 = arith.addf %22, %25 : vector<16x8xf32>
    %cst_7 = arith.constant 2.000000e-01 : f32
    %27 = vector.broadcast %cst_7 : f32 to vector<16x8xf32>
    %28 = arith.mulf %26, %27 : vector<16x8xf32>
    %c0_8 = arith.constant 0 : index
    %c0_9 = arith.constant 0 : index
    %c0_10 = arith.constant 0 : index
    %29 = vector.load %arg3[%c0_8, %c0_9, %c0_10] : memref<1x16x8xf32, #tpu.memory_space<vmem>>, vector<1x16x8xf32>
    %30 = vector.shape_cast %29 : vector<1x16x8xf32> to vector<16x8xf32>
    %31 = vector.shape_cast %28 : vector<16x8xf32> to vector<1x16x8xf32>
    tpu.vector_store %arg3[%c0_8, %c0_9, %c0_10], %31 {strides = array<i32>} : memref<1x16x8xf32, #tpu.memory_space<vmem>>, vector<1x16x8xf32>,
    return
  }
  func.func @transform_0(%arg0: i32, %arg1: i32) -> (i32, i32, i32) {
    %c0_i32 = arith.constant 0 : i32
    %c0_i32_0 = arith.constant 0 : i32
    %c0_i32_1 = arith.constant 0 : i32
    return %arg0, %c0_i32, %c0_i32_0 : i32, i32, i32
  }
  func.func @transform_1(%arg0: i32, %arg1: i32) -> (i32, i32, i32) {
    %c0_i32 = arith.constant 0 : i32
    %c0_i32_0 = arith.constant 0 : i32
    return %arg0, %arg1, %c0_i32 : i32, i32, i32
  }
}

</mosaic_0001>

<llo_original>
// kernel: tpu_custom_call.1
$region0: #{tpu_custom_call.1}
  #allocation0 [shape = 'u32[]', space=smem, size = 0x4, offset = 0x4, fixed_abs, tag = 'smem constant byte address 0x4 - core index']
  #allocation1 [shape = 'u32[144,128]{1,0:T(1,128)}', space=vmem, size = 0x12000, scoped, tag = 'internal scratch']
  #allocation2 [shape = 'f32[32,8]{1,0:T(8,128)}', space=vmem, size = 0x4000, scoped, tag = 'scratch operand']
  %s0 = inlined_call_operand.vmem [shape: f32[2,16,8], index: 0, kind: input, shape index: {}]
  %s1 = inlined_call_operand.vmem [shape: f32[2,16,8], index: 1, kind: output, shape index: {}]
  %s2 = sld [smem:[#allocation0]]
  $region41: #{tpu_custom_call.1} parent=0
    _
  %s4 = ssub.s32 1, %s2
  %s5 = scalar_select 0, %s4, %s2
  loop: start=0, step=1, limit=4
  $region2: #{tpu_custom_call.1} parent=0 // loop_pre_header
    _
  $region3: #{tpu_custom_call.1} parent=0 // loop_header
    %s7 = sphi 0, %s11
    %p8 = scmp.ge.s32.totalorder %s7, 4
    %s14 = sphi 0, %s26
    %s15 = sphi 0, %s22
    %s16 = sphi 0, %s14
    %s17 = sphi 0, %s15
    %s18 = sphi 0, %s16
    %s19 = sphi 0, %s17
    %s29 = sphi 0, %s31
    %s32 = sphi 0, %s29
    %s33 = sphi 0, %s32
    %s49 = sphi 0, %s33
    %s57 = sphi 0, %s59
    %s60 = sphi 0, %s57
    %s61 = sphi 0, %s60
    %s77 = sphi 0, %s61
  $region4: #{tpu_custom_call.1} parent=0 // loop_header_branch
    %10 = sbr.rel (%p8) target = $region8
  $region5: #{tpu_custom_call.1} parent=0 // loop_body
    %s12 = ssub.s32 %s7, 1
    %s13 = ssub.s32 %s7, 2
    %s20 = sadd.s32 1, %s15
    %p21 = scmp.ge.s32.totalorder %s20, 1
    %s22 = scalar_select %p21, 0, %s20
    %s23 = sadd.s32 1, %s14
    %s24 = scalar_select %p21, %s23, %s14
    %p25 = scmp.ge.s32.totalorder %s24, 2
    %s26 = scalar_select %p25, 0, %s24
    %s27 = ssub.s32 %s14, %s26
    %p28 = scmp.eq.s32.totalorder %s27, 0
    %s30 = sadd.s32 %s29, 1
    %s31 = scalar_select %p28, %s29, %s30
    %p34 = pneg %p28
    %p35 = scmp.eq.s32.totalorder %s7, 1
    %p36 = por %p34, %p35
    %p37 = scmp.ne.s32.totalorder %s29, %s32
    %p38 = scmp.eq.s32.totalorder %s7, 0
    %p39 = por %p37, %p38
    %p40 = scmp.ne.s32.totalorder %s29, %s32
    %p41 = scmp.eq.s32.totalorder %s12, 1
    %p42 = por %p40, %p41
    %p43 = scmp.ne.s32.totalorder %s32, %s33
    %p44 = scmp.eq.s32.totalorder %s12, 0
    %p45 = por %p43, %p44
    %p46 = scmp.ne.s32.totalorder %s32, %s33
    %p47 = scmp.eq.s32.totalorder %s13, 1
    %p48 = por %p46, %p47
    %p50 = scmp.ne.s32.totalorder %s33, %s49
    %p51 = scmp.eq.s32.totalorder %s13, 0
    %p52 = por %p50, %p51
    %s53 = ssub.s32 %s14, %s26
    %s54 = ssub.s32 %s15, %s22
    %s55 = sor.u32 %s53, %s54
    %p56 = scmp.eq.s32.totalorder %s55, 0
    %s58 = sadd.s32 %s57, 1
    %s59 = scalar_select %p56, %s57, %s58
    %p62 = pneg %p56
    %p63 = scmp.eq.s32.totalorder %s7, 1
    %p64 = por %p62, %p63
    %p65 = scmp.ne.s32.totalorder %s57, %s60
    %p66 = scmp.eq.s32.totalorder %s7, 0
    %p67 = por %p65, %p66
    %p68 = scmp.ne.s32.totalorder %s57, %s60
    %p69 = scmp.eq.s32.totalorder %s12, 1
    %p70 = por %p68, %p69
    %p71 = scmp.ne.s32.totalorder %s60, %s61
    %p72 = scmp.eq.s32.totalorder %s12, 0
    %p73 = por %p71, %p72
    %p74 = scmp.ne.s32.totalorder %s60, %s61
    %p75 = scmp.eq.s32.totalorder %s13, 1
    %p76 = por %p74, %p75
    %p78 = scmp.ne.s32.totalorder %s61, %s77
    %p79 = scmp.eq.s32.totalorder %s13, 0
    %p80 = por %p78, %p79
    %p81 = scmp.le.s32.totalorder 1, %s7
    %p82 = scmp.lt.s32.totalorder %s7, 3
    %p83 = pnand %p81, %p82
    %p84 = pneg %p83
    // Predicated region
    $region9: #{tpu_custom_call.1} parent=5 // pred_check
      _
    $region10: #{tpu_custom_call.1} parent=5 // pred_check_branch
      %86 = sbr.rel (%p83) target = $region12
    $region11: #{tpu_custom_call.1} parent=5 // pred_region
      %s87 = ssub.s32 %s7, 1
    $region12: #{tpu_custom_call.1} parent=5 // pred_fallthru
      _
    %p88 = scmp.lt.s32.totalorder %s7, 2
    // Predicated region
    $region13: #{tpu_custom_call.1} parent=5 // pred_check
      %p89 = pneg %p88
    $region14: #{tpu_custom_call.1} parent=5 // pred_check_branch
      %91 = sbr.rel (%p89) target = $region16
    $region15: #{tpu_custom_call.1} parent=5 // pred_region
      // Predicated region
      $region17: #{tpu_custom_call.1} parent=15 // pred_check
        %p92 = pneg %p39
      $region18: #{tpu_custom_call.1} parent=15 // pred_check_branch
        %94 = sbr.rel (%p92) target = $region20
      $region19: #{tpu_custom_call.1} parent=15 // pred_region
        %p95 = scmp.lt.s32.totalorder %s14, 1
        %s96 = scalar_select %p95, %s14, 1
        %s97 = smul.addr %s96, 2
        %s98 = smul.addr %s97, 8
        %s99 = scalar_lea.vmem %s0, %s98
      $region20: #{tpu_custom_call.1} parent=15 // pred_fallthru
        _
    $region16: #{tpu_custom_call.1} parent=5 // pred_fallthru
      _
    %p100 = scmp.le.s32.totalorder 1, %s7
    %p101 = scmp.lt.s32.totalorder %s7, 3
    %p102 = pnand %p100, %p101
    %p103 = pneg %p102
    // Predicated region
    $region21: #{tpu_custom_call.1} parent=5 // pred_check
      _
    $region22: #{tpu_custom_call.1} parent=5 // pred_check_branch
      %105 = sbr.rel (%p102) target = $region24
    $region23: #{tpu_custom_call.1} parent=5 // pred_region
      %s106 = ssub.s32 %s7, 1
      %p107 = scmp.lt.s32.totalorder %s16, 1
      %s108 = scalar_select %p107, %s16, 1
      %s109 = smul.addr %s108, 2
      %s110 = smul.addr %s109, 8
      %s111 = scalar_lea.vmem %s0, %s110
      %p112 = pneg %p45
      %p113 = pneg %p42
      %p114 = pneg %p73
      %p115 = pneg %p70
      %s116 = smul.u32 2, %s17
      %p117 = scmp.lt.s32.totalorder %s16, 1
      %s118 = scalar_select %p117, %s16, 1
      %p119 = scmp.lt.s32.totalorder %s116, 1
      %s120 = scalar_select %p119, %s116, 1
      %s121 = smul.addr %s118, 2
      %s122 = sadd.s32 %s120, %s121
      %s123 = smul.addr %s122, 8
      %s124 = scalar_lea.vmem %s1, %s123
      %p125 = scmp.lt.s32.totalorder %s16, 1
      %s126 = scalar_select %p125, %s16, 1
      %s127 = smul.addr %s126, 2
      %s128 = smul.addr %s127, 8
      %s129 = scalar_lea.vmem %s0, %s128
      %s130 = smul.u32 2, %s17
      %p131 = scmp.lt.s32.totalorder %s16, 1
      %s132 = scalar_select %p131, %s16, 1
      %p133 = scmp.lt.s32.totalorder %s130, 1
      %s134 = scalar_select %p133, %s130, 1
      %s135 = smul.addr %s132, 2
      %s136 = sadd.s32 %s134, %s135
      %s137 = smul.addr %s136, 8
      %s138 = scalar_lea.vmem %s1, %s137
      %s139 = smul.u32 2, %s17
      %p140 = scmp.eq.s32.totalorder %s17, 0
      // Predicated region
      $region25: #{tpu_custom_call.1} parent=23 // pred_check
        %p141 = pneg %p140
      $region26: #{tpu_custom_call.1} parent=23 // pred_check_branch
        %143 = sbr.rel (%p141) target = $region28
      $region27: #{tpu_custom_call.1} parent=23 // pred_region
        %v144 = vld [vmem:[%s129] sm:$0xff]
        %v145 = vld [vmem:[%s129 + $0x8] sm:$0xff]
        %vm146 = vcmask 64512
        %147 = vst.msk [vmem:[#allocation2 + $0x8] sm:$0xff] %vm146, %v144
        %148 = vst.msk [vmem:[#allocation2 + $0x10] sm:$0xff] %vm146, %v145
        %v149 = vld [vmem:[%s129] sm:$0x1]
        %v150 = vlaneseq
        %v151 = vshrl.u32 %v150, 7
        %v152 = vsub.s32 0, %v151
        %v153 = vrot.slane %v149, %v152
        %154 = vst.msk [vmem:[#allocation2] sm:$0xff] %vm146, %v153
        %v155 = vld [vmem:[%s129 + $0xf] sm:$0x1]
        %v156 = vlaneseq
        %v157 = vshrl.u32 %v156, 7
        %v158 = vsub.s32 0, %v157
        %v159 = vrot.slane %v155, %v158
        %160 = vst.msk [vmem:[#allocation2 + $0x18] sm:$0xff] %vm146, %v159
      $region28: #{tpu_custom_call.1} parent=23 // pred_fallthru
        _
      %s161 = smul.u32 %s17, 16
      %s162 = sadd.s32 %s161, 6
      %s163 = scalar_lea.vmem [#allocation2], %s162
      %v164 = vld [vmem:[%s163] sm:$0xff]
      %v165 = vld [vmem:[%s163 + $0x8] sm:$0xff]
      %v166 = vadd.f32 %v164, 0.0
      %v167 = vadd.f32 %v165, 0.0
      %s168 = sadd.s32 %s161, 7
      %s169 = scalar_lea.vmem [#allocation2], %s168
      %v170 = vld [vmem:[%s169] sm:$0xff]
      %v171 = vld [vmem:[%s169 + $0x8] sm:$0xff]
      %v172 = vadd.f32 %v166, %v170
      %v173 = vadd.f32 %v167, %v171
      %s174 = sadd.s32 %s161, 8
      %s175 = scalar_lea.vmem [#allocation2], %s174
      %v176 = vld [vmem:[%s175] sm:$0xff]
      %v177 = vld [vmem:[%s175 + $0x8] sm:$0xff]
      %v178 = vadd.f32 %v172, %v176
      %v179 = vadd.f32 %v173, %v177
      %s180 = sadd.s32 %s161, 9
      %s181 = scalar_lea.vmem [#allocation2], %s180
      %v182 = vld [vmem:[%s181] sm:$0xff]
      %v183 = vld [vmem:[%s181 + $0x8] sm:$0xff]
      %v184 = vadd.f32 %v178, %v182
      %v185 = vadd.f32 %v179, %v183
      %s186 = sadd.s32 %s161, 10
      %s187 = scalar_lea.vmem [#allocation2], %s186
      %v188 = vld [vmem:[%s187] sm:$0xff]
      %v189 = vld [vmem:[%s187 + $0x8] sm:$0xff]
      %v190 = vadd.f32 %v184, %v188
      %v191 = vadd.f32 %v185, %v189
      %v192 = vmul.f32 %v190, 0.2
      %v193 = vmul.f32 %v191, 0.2
      %vm194 = vcmask 64512
      %195 = vst.msk [vmem:[%s138] sm:$0xff] %vm194, %v192
      %196 = vst.msk [vmem:[%s138 + $0x8] sm:$0xff] %vm194, %v193
      %s197 = smul.u32 2, %s17
      %p198 = scmp.lt.s32.totalorder %s16, 1
      %s199 = scalar_select %p198, %s16, 1
      %p200 = scmp.lt.s32.totalorder %s197, 1
      %s201 = scalar_select %p200, %s197, 1
      %s202 = smul.addr %s199, 2
      %s203 = sadd.s32 %s201, %s202
      %s204 = smul.addr %s203, 8
      %s205 = scalar_lea.vmem %s1, %s204
      // Predicated region
      $region29: #{tpu_custom_call.1} parent=23 // pred_check
        %p206 = pneg %p70
      $region30: #{tpu_custom_call.1} parent=23 // pred_check_branch
        %208 = sbr.rel (%p206) target = $region32
      $region31: #{tpu_custom_call.1} parent=23 // pred_region
        %s209 = smul.u32 2, %s17
      $region32: #{tpu_custom_call.1} parent=23 // pred_fallthru
        _
    $region24: #{tpu_custom_call.1} parent=5 // pred_fallthru
      _
    %p210 = scmp.le.s32.totalorder 2, %s7
    // Predicated region
    $region33: #{tpu_custom_call.1} parent=5 // pred_check
      %p211 = pneg %p210
    $region34: #{tpu_custom_call.1} parent=5 // pred_check_branch
      %213 = sbr.rel (%p211) target = $region36
    $region35: #{tpu_custom_call.1} parent=5 // pred_region
      %s214 = ssub.s32 %s7, 2
      // Predicated region
      $region37: #{tpu_custom_call.1} parent=35 // pred_check
        %p215 = pneg %p76
      $region38: #{tpu_custom_call.1} parent=35 // pred_check_branch
        %217 = sbr.rel (%p215) target = $region40
      $region39: #{tpu_custom_call.1} parent=35 // pred_region
        %s218 = smul.u32 2, %s19
        %p219 = scmp.lt.s32.totalorder %s18, 1
        %s220 = scalar_select %p219, %s18, 1
        %p221 = scmp.lt.s32.totalorder %s218, 1
        %s222 = scalar_select %p221, %s218, 1
        %s223 = smul.addr %s220, 2
        %s224 = sadd.s32 %s222, %s223
        %s225 = smul.addr %s224, 8
        %s226 = scalar_lea.vmem %s1, %s225
      $region40: #{tpu_custom_call.1} parent=35 // pred_fallthru
        _
    $region36: #{tpu_custom_call.1} parent=5 // pred_fallthru
      _
  $region6: #{tpu_custom_call.1} parent=0 // loop_footer
    %s11 = sadd.s32 1, %s7
  $region7: #{tpu_custom_call.1} parent=0 // loop_footer_branch
    %6 = sbr.rel target = $region3
  $region8: #{tpu_custom_call.1} parent=0 // loop_exit
    _

</llo_original>
